<compile_context>
chip_gen: v6e
topology: v6e:2x2x1
jax: 0.10.0
libtpu: 0.0.40
codegen_flags: <defaults>
</compile_context>

<pallas_src>
import functools

import jax
import jax.numpy as jnp
from jax.experimental import pallas as pl
from jax.experimental.pallas import tpu as pltpu


def _round_up(x, m):
    return ((x + m - 1) // m) * m


# ------------------------------ Pallas kernel -------------------------------

def _gemm_bias_act_kernel(a_ref, w_ref, shift_ref, out_ref, acc_ref, *, act):
    """K-tiled GEMM accumulated in f32 scratch; epilogue (+shift, act) on last K step."""
    @pl.when(pl.program_id(1) == 0)
    def _init():
        acc_ref[...] = jnp.zeros_like(acc_ref)

    acc_ref[...] += jnp.dot(a_ref[...], w_ref[...],
                            preferred_element_type=jnp.float32)

    @pl.when(pl.program_id(1) == pl.num_programs(1) - 1)
    def _finalize():
        y = acc_ref[...] + shift_ref[...]
        if act == "relu":
            y = jnp.maximum(y, 0.0)
        elif act == "tanh":
            y = jnp.tanh(y)
        out_ref[...] = y.astype(out_ref.dtype)


def _pick_tiles(m, k):
    """(tm, m_pad, tk, k_pad): VMEM-bounded tiles; >=2 M blocks when possible."""
    m8 = _round_up(m, 8)
    if m8 > 256:
        tm = 256
    elif m8 >= 16:
        tm = _round_up(m8 // 2, 8)       # >=2 M blocks -> both v7x TensorCores
    else:
        tm = m8
    m_pad = _round_up(m8, tm)
    tk = min(512, _round_up(k, 128))     # K tile: multiple of 128 (lane dim of A)
    k_pad = _round_up(k, tk)
    return tm, m_pad, tk, k_pad


def fused_gemm(a, w, shift, act):
    """act(a @ w + shift): bf16 MXU operands, f32 accumulation/epilogue.

    a: (M, K) f32, w: (K, N) f32, shift: (N,) f32.  M/K are zero-padded to tile
    multiples, N to a multiple of 128 (lane-dense unmasked stores); the result
    is sliced back to (M, N) f32.
    """
    m, k = a.shape
    _, n = w.shape
    tm, m_pad, tk, k_pad = _pick_tiles(m, k)
    n_pad = _round_up(n, 128)

    a_p = jnp.pad(a, ((0, m_pad - m), (0, k_pad - k))).astype(jnp.bfloat16)
    w_p = jnp.pad(w, ((0, k_pad - k), (0, n_pad - n))).astype(jnp.bfloat16)
    shift_p = jnp.pad(shift.astype(jnp.float32), (0, n_pad - n)).reshape(1, n_pad)

    out = pl.pallas_call(
        functools.partial(_gemm_bias_act_kernel, act=act),
        out_shape=jax.ShapeDtypeStruct((m_pad, n_pad), jnp.float32),
        grid_spec=pltpu.PrefetchScalarGridSpec(
            num_scalar_prefetch=0,
            grid=(m_pad // tm, k_pad // tk),
            in_specs=[
                pl.BlockSpec((tm, tk), lambda i, kk: (i, kk)),     # im2col rows
                pl.BlockSpec((tk, n_pad), lambda i, kk: (kk, 0)),  # folded weight
                pl.BlockSpec((1, n_pad), lambda i, kk: (0, 0)),    # bias/BN shift
            ],
            out_specs=pl.BlockSpec((tm, n_pad), lambda i, kk: (i, 0)),
            scratch_shapes=[pltpu.VMEM((tm, n_pad), jnp.float32)],
        ),
        compiler_params=pltpu.CompilerParams(
            dimension_semantics=("parallel", "arbitrary"),
        ),
    )(a_p, w_p, shift_p)
    return out[:m, :n]


# --------------------------- conv layer wrappers ----------------------------

def _im2col(x, kh, kw, stride, padding):
    """x: (N,H,W,C) -> (N*Ho*Wo, kh*kw*C) patch matrix (tap-major, C minor)."""
    n, h, w, c = x.shape
    if padding:
        x = jnp.pad(x, ((0, 0), (padding, padding), (padding, padding), (0, 0)))
    ho = (h + 2 * padding - kh) // stride + 1
    wo = (w + 2 * padding - kw) // stride + 1
    cols = []
    for i in range(kh):
        for j in range(kw):
            cols.append(
                x[:, i:i + stride * (ho - 1) + 1:stride,
                     j:j + stride * (wo - 1) + 1:stride, :])
    a = jnp.concatenate(cols, axis=-1) if len(cols) > 1 else cols[0]
    return a.reshape(n * ho * wo, kh * kw * c), (n, ho, wo)


def conv_bn_act(x, layer, *, stride, padding, act):
    w = layer["w"]                       # (kh, kw, cin, cout) HWIO (scale-folded)
    kh, kw, cin, cout = w.shape
    a, (n, ho, wo) = _im2col(x, kh, kw, stride, padding)
    y = fused_gemm(a, w.reshape(kh * kw * cin, cout), layer["shift"], act)
    return y.reshape(n, ho, wo, cout)


def convT_bn_act(x, layer, *, act):
    """ConvTranspose2d(k=4, s=2, p=1) via 4 output-parity phases (no zero MACs).

    With the forward-conv HWIO weight W (flipped/transposed ConvT weight):
      out[2p+r, 2q+s] = sum over the 2x2 sub-kernel W[r_start::2, s_start::2]
    applied to x padded by one zero row/col at the top/left (parity 0) or
    bottom/right (parity 1).
    """
    w = layer["w"]                       # (4, 4, cin, cout)
    n, h, wd, cin = x.shape
    cout = w.shape[-1]
    phases = []
    for r in (0, 1):
        for s in (0, 1):
            pad_r = (1, 0) if r == 0 else (0, 1)
            pad_s = (1, 0) if s == 0 else (0, 1)
            sub_w = w[(0 if r == 0 else 1)::2, (0 if s == 0 else 1)::2]  # (2,2,ci,co)
            xp = jnp.pad(x, ((0, 0), pad_r, pad_s, (0, 0)))
            a, _ = _im2col(xp, 2, 2, 1, 0)
            y = fused_gemm(a, sub_w.reshape(4 * cin, cout), layer["shift"], act)
            phases.append(y.reshape(n, h, wd, cout))
    ph = jnp.stack(phases, axis=0).reshape(2, 2, n, h, wd, cout)
    out = ph.transpose(2, 3, 0, 4, 1, 5).reshape(n, 2 * h, 2 * wd, cout)
    return out


# ------------------------------- full model ---------------------------------

def stacked_autoencoder_forward(x, params):
    """x: (N, H, W, C_in) NHWC float32. Returns (e3, d3)."""
    p = params
    e1 = conv_bn_act(x, p["enc1a"], stride=2, padding=1, act="relu")
    e1 = conv_bn_act(e1, p["enc1b"], stride=1, padding=1, act="relu")
    e2 = conv_bn_act(e1, p["enc2a"], stride=2, padding=1, act="relu")
    e2 = conv_bn_act(e2, p["enc2b"], stride=1, padding=1, act="relu")
    e3 = conv_bn_act(e2, p["enc3a"], stride=2, padding=1, act="relu")
    e3 = conv_bn_act(e3, p["enc3b"], stride=1, padding=1, act="relu")

    d1 = convT_bn_act(e3, p["dec1"], act="relu")
    d1 = conv_bn_act(jnp.concatenate([d1, e2], axis=-1), p["refine1"],
                     stride=1, padding=0, act="none")
    d2 = convT_bn_act(d1, p["dec2"], act="relu")
    d2 = conv_bn_act(jnp.concatenate([d2, e1], axis=-1), p["refine2"],
                     stride=1, padding=0, act="none")
    d3 = convT_bn_act(d2, p["dec3"], act="tanh")
    return e3, d3


# ------------------------------- parameters ---------------------------------

def _conv_layer(key, kh, kw, cin, cout, with_bn):
    kw_, kb, kg, kbt, km, kv = jax.random.split(key, 6)
    bound = 1.0 / jnp.sqrt(jnp.float32(cin * kh * kw))
    w = jax.random.uniform(kw_, (kh, kw, cin, cout), jnp.float32, -bound, bound)
    b = jax.random.uniform(kb, (cout,), jnp.float32, -bound, bound)
    if with_bn:
        gamma = jax.random.uniform(kg, (cout,), jnp.float32, 0.5, 1.5)
        beta = jax.random.uniform(kbt, (cout,), jnp.float32, -0.1, 0.1)
        mean = 0.1 * jax.random.normal(km, (cout,), jnp.float32)
        var = jax.random.uniform(kv, (cout,), jnp.float32, 0.5, 1.5)
        s = gamma / jnp.sqrt(var + 1e-5)
        # Fold the BN scale directly into the conv weight columns.
        return {"w": w * s, "shift": (b - mean) * s + beta}
    return {"w": w, "shift": b}


def init_params(key, c_in, hidden):
    h0, h1, h2 = hidden
    ks = jax.random.split(key, 11)
    return {
        "enc1a": _conv_layer(ks[0], 3, 3, c_in, h0, True),
        "enc1b": _conv_layer(ks[1], 3, 3, h0, h0, True),
        "enc2a": _conv_layer(ks[2], 3, 3, h0, h1, True),
        "enc2b": _conv_layer(ks[3], 3, 3, h1, h1, True),
        "enc3a": _conv_layer(ks[4], 3, 3, h1, h2, True),
        "enc3b": _conv_layer(ks[5], 3, 3, h2, h2, True),
        "dec1": _conv_layer(ks[6], 4, 4, h2, h1, True),
        "dec2": _conv_layer(ks[7], 4, 4, h1, h0, True),
        "dec3": _conv_layer(ks[8], 4, 4, h0, c_in, False),     # tanh head, no BN
        "refine1": _conv_layer(ks[9], 1, 1, 2 * h1, h1, False),
        "refine2": _conv_layer(ks[10], 1, 1, 2 * h0, h0, False),
    }


# ------------------------------ JAX reference --------------------------------

def reference_forward(x, params):
    """bf16-matched XLA reference (same operand precision as the kernels)."""
    def conv(x, layer, stride, padding, act, lhs_dilation=(1, 1)):
        y = jax.lax.conv_general_dilated(
            x.astype(jnp.bfloat16), layer["w"].astype(jnp.bfloat16),
            window_strides=(stride, stride),
            padding=((padding, padding), (padding, padding)),
            lhs_dilation=lhs_dilation,
            dimension_numbers=("NHWC", "HWIO", "NHWC"),
            preferred_element_type=jnp.float32)
        y = y + layer["shift"]
        if act == "relu":
            y = jnp.maximum(y, 0.0)
        elif act == "tanh":
            y = jnp.tanh(y)
        return y

    def convT(x, layer, act):
        return conv(x, layer, 1, 2, act, lhs_dilation=(2, 2))

    e1 = conv(x, params["enc1a"], 2, 1, "relu")
    e1 = conv(e1, params["enc1b"], 1, 1, "relu")
    e2 = conv(e1, params["enc2a"], 2, 1, "relu")
    e2 = conv(e2, params["enc2b"], 1, 1, "relu")
    e3 = conv(e2, params["enc3a"], 2, 1, "relu")
    e3 = conv(e3, params["enc3b"], 1, 1, "relu")
    d1 = convT(e3, params["dec1"], "relu")
    d1 = conv(jnp.concatenate([d1, e2], axis=-1), params["refine1"], 1, 0, "none")
    d2 = convT(d1, params["dec2"], "relu")
    d2 = conv(jnp.concatenate([d2, e1], axis=-1), params["refine2"], 1, 0, "none")
    d3 = convT(d2, params["dec3"], "tanh")
    return e3, d3


# ----------------------------------- main ------------------------------------

if __name__ == "__main__":
    N, H, W, C_IN = 2, 16, 16, 3
    HIDDEN = (8, 16, 32)   # scaled-down analogue of [64, 128, 256]

    key = jax.random.PRNGKey(0)
    kx, kp = jax.random.split(key)
    x = jax.random.normal(kx, (N, H, W, C_IN), jnp.float32)
    params = init_params(kp, C_IN, HIDDEN)

    e3, d3 = stacked_autoencoder_forward(x, params)
    e3, d3 = jax.block_until_ready(e3), jax.block_until_ready(d3)

    e3_ref, d3_ref = reference_forward(x, params)
    e3_ref, d3_ref = jax.block_until_ready(e3_ref), jax.block_until_ready(d3_ref)

    assert e3.shape == (N, H // 8, W // 8, HIDDEN[2])
    assert d3.shape == (N, H, W, C_IN)
    assert jnp.allclose(e3, e3_ref, atol=1e-2, rtol=1e-2)
    assert jnp.allclose(d3, d3_ref, atol=1e-2, rtol=1e-2)
    print("KERNEL_OK")
</pallas_src>

<mosaic_0001>
module attributes {stable_mosaic.version = 11 : i64} {
  func.func @_gemm_bias_act_kernel(%arg0: i32, %arg1: i32, %arg2: memref<64x128xbf16, #tpu.memory_space<vmem>>, %arg3: memref<128x128xbf16, #tpu.memory_space<vmem>>, %arg4: memref<1x128xf32, #tpu.memory_space<vmem>>, %arg5: memref<64x128xf32, #tpu.memory_space<vmem>>, %arg6: memref<64x128xf32, #tpu.memory_space<vmem>>) attributes {dimension_semantics = [#tpu.dimension_semantics<parallel>, #tpu.dimension_semantics<arbitrary>], iteration_bounds = array<i64: 2, 1>, scalar_prefetch = 0 : i64, scratch_operands = 1 : i64, tpu.core_type = #tpu.core_type<tc>, window_params = [{transform_indices = @transform_0, window_bounds = array<i64: 64, 128>}, {transform_indices = @transform_1, window_bounds = array<i64: 128, 128>}, {pipeline_mode = #tpu.pipeline_mode<synchronous>, transform_indices = @transform_2, window_bounds = array<i64: 1, 128>}, {transform_indices = @transform_3, window_bounds = array<i64: 64, 128>}]} {
    %c0_i32 = arith.constant 0 : i32
    %0 = arith.cmpi eq, %arg1, %c0_i32 : i32
    %1 = arith.extui %0 : i1 to i32
    %c0_i32_0 = arith.constant 0 : i32
    %2 = arith.cmpi ne, %1, %c0_i32_0 : i32
    scf.if %2 {
      %cst_10 = arith.constant 0.000000e+00 : f32
      %12 = vector.broadcast %cst_10 : f32 to vector<64x128xf32>
      %c0_11 = arith.constant 0 : index
      %c0_12 = arith.constant 0 : index
      %13 = vector.load %arg6[%c0_11, %c0_12] : memref<64x128xf32, #tpu.memory_space<vmem>>, vector<64x128xf32>
      tpu.vector_store %arg6[%c0_11, %c0_12], %12 {strides = array<i32>} : memref<64x128xf32, #tpu.memory_space<vmem>>, vector<64x128xf32>,
    } else {
    }
    %c0 = arith.constant 0 : index
    %c0_1 = arith.constant 0 : index
    %3 = vector.load %arg6[%c0, %c0_1] : memref<64x128xf32, #tpu.memory_space<vmem>>, vector<64x128xf32>
    %c0_2 = arith.constant 0 : index
    %c0_3 = arith.constant 0 : index
    %4 = vector.load %arg2[%c0_2, %c0_3] : memref<64x128xbf16, #tpu.memory_space<vmem>>, vector<64x128xbf16>
    %c0_4 = arith.constant 0 : index
    %c0_5 = arith.constant 0 : index
    %5 = vector.load %arg3[%c0_4, %c0_5] : memref<128x128xbf16, #tpu.memory_space<vmem>>, vector<128x128xbf16>
    %cst = arith.constant dense<0.000000e+00> : vector<64x128xf32>
    %6 = tpu.matmul %4, %5, %cst {dimension_numbers = #tpu.dot_dimension_numbers<[1], [0], [0], [1], [0, 0, 1, 1], [], []>} : vector<64x128xbf16>, vector<128x128xbf16>, vector<64x128xf32> -> vector<64x128xf32>
    %7 = arith.addf %3, %6 : vector<64x128xf32>
    %c0_6 = arith.constant 0 : index
    %c0_7 = arith.constant 0 : index
    %8 = vector.load %arg6[%c0_6, %c0_7] : memref<64x128xf32, #tpu.memory_space<vmem>>, vector<64x128xf32>
    tpu.vector_store %arg6[%c0_6, %c0_7], %7 {strides = array<i32>} : memref<64x128xf32, #tpu.memory_space<vmem>>, vector<64x128xf32>,
    %c0_i32_8 = arith.constant 0 : i32
    %9 = arith.cmpi eq, %arg1, %c0_i32_8 : i32
    %10 = arith.extui %9 : i1 to i32
    %c0_i32_9 = arith.constant 0 : i32
    %11 = arith.cmpi ne, %10, %c0_i32_9 : i32
    scf.if %11 {
      %c0_10 = arith.constant 0 : index
      %c0_11 = arith.constant 0 : index
      %12 = vector.load %arg6[%c0_10, %c0_11] : memref<64x128xf32, #tpu.memory_space<vmem>>, vector<64x128xf32>
      %c0_12 = arith.constant 0 : index
      %c0_13 = arith.constant 0 : index
      %13 = vector.load %arg4[%c0_12, %c0_13] : memref<1x128xf32, #tpu.memory_space<vmem>>, vector<1x128xf32>
      %14 = vector.broadcast %13 : vector<1x128xf32> to vector<64x128xf32>
      %15 = arith.addf %12, %14 : vector<64x128xf32>
      %cst_14 = arith.constant 0.000000e+00 : f32
      %16 = vector.broadcast %cst_14 : f32 to vector<64x128xf32>
      %17 = arith.maximumf %15, %16 : vector<64x128xf32>
      %c0_15 = arith.constant 0 : index
      %c0_16 = arith.constant 0 : index
      %18 = vector.load %arg5[%c0_15, %c0_16] : memref<64x128xf32, #tpu.memory_space<vmem>>, vector<64x128xf32>
      tpu.vector_store %arg5[%c0_15, %c0_16], %17 {strides = array<i32>} : memref<64x128xf32, #tpu.memory_space<vmem>>, vector<64x128xf32>,
    } else {
    }
    return
  }
  func.func @transform_0(%arg0: i32, %arg1: i32) -> (i32, i32) {
    %c0_i32 = arith.constant 0 : i32
    return %arg0, %arg1 : i32, i32
  }
  func.func @transform_1(%arg0: i32, %arg1: i32) -> (i32, i32) {
    %c0_i32 = arith.constant 0 : i32
    %c0_i32_0 = arith.constant 0 : i32
    return %arg1, %c0_i32 : i32, i32
  }
  func.func @transform_2(%arg0: i32, %arg1: i32) -> (i32, i32) {
    %c0_i32 = arith.constant 0 : i32
    %c0_i32_0 = arith.constant 0 : i32
    %c0_i32_1 = arith.constant 0 : i32
    return %c0_i32, %c0_i32_0 : i32, i32
  }
  func.func @transform_3(%arg0: i32, %arg1: i32) -> (i32, i32) {
    %c0_i32 = arith.constant 0 : i32
    %c0_i32_0 = arith.constant 0 : i32
    return %arg0, %c0_i32 : i32, i32
  }
}

</mosaic_0001>

<llo_original>
// kernel: tpu_custom_call.1
$region0: #{tpu_custom_call.1}
  #allocation0 [shape = 'u32[]', space=smem, size = 0x4, offset = 0x4, fixed_abs, tag = 'smem constant byte address 0x4 - core index']
  #allocation1 [shape = 'u32[144,128]{1,0:T(1,128)}', space=vmem, size = 0x12000, scoped, tag = 'internal scratch']
  #allocation2 [shape = 'f32[64,128]{1,0:T(8,128)}', space=vmem, size = 0x8000, scoped, tag = 'scratch operand']
  %s0 = inlined_call_operand.hbm [shape: bf16[128,128], index: 0, kind: input, shape index: {}]
  %s1 = inlined_call_operand.hbm [shape: bf16[128,128], index: 1, kind: input, shape index: {}]
  %s2 = inlined_call_operand.vmem [shape: f32[1,128], index: 2, kind: input, shape index: {}]
  %s3 = inlined_call_operand.hbm [shape: f32[128,128], index: 3, kind: output, shape index: {}]
  %s4 = sld [smem:[#allocation0]]
  $region61: #{tpu_custom_call.1} parent=0
    _
  %s6 = ssub.s32 1, %s4
  %s7 = scalar_select 0, %s6, %s4
  $region1: #{tpu_custom_call.1} parent=0
    #allocation3 [shape = 'u8[32768]{0}', space=vmem, size = 0x8000, scoped, tag = 'input window, operand 0']
    #allocation4 [shape = 's32[2]{0}', space=sflag, size = 0x8, scoped, tag = 'scoped memory for tpu_custom_call.1']
    #allocation5 [shape = 's32[2]{0}', space=sflag, size = 0x8, scoped, tag = 'scoped memory for tpu_custom_call.1']
    #allocation6 [shape = 'u8[32768]{0}', space=vmem, size = 0x8000, scoped, tag = 'input window, operand 1, single buffered']
    #allocation7 [shape = 's32[1]{0}', space=sflag, size = 0x4, scoped, tag = 'scoped memory for tpu_custom_call.1']
    #allocation8 [shape = 'u8[65536]{0}', space=vmem, size = 0x10000, scoped, tag = 'output window, operand 0']
    %8 = vsyncpa [#allocation4], 0
    %s9 = scalar_lea.sflag [#allocation4], 1
    %10 = vsyncpa %s9, 0
    %11 = vsyncpa [#allocation7], 0
    %12 = vsyncpa [#allocation5], 0
    %s13 = scalar_lea.sflag [#allocation5], 1
    %14 = vsyncpa %s13, 0
    loop: start=0, step=1, limit=4
    $region2: #{tpu_custom_call.1} parent=1 // loop_pre_header
      _
    $region3: #{tpu_custom_call.1} parent=1 // loop_header
      %s16 = sphi 0, %s20
      %p17 = scmp.ge.s32.totalorder %s16, 4
      %s23 = sphi 0, %s35
      %s24 = sphi 0, %s31
      %s25 = sphi 0, %s23
      %s26 = sphi 0, %s24
      %s27 = sphi 0, %s25
      %s28 = sphi 0, %s26
      %s40 = sphi 0, %s42
      %s43 = sphi 0, %s40
      %s44 = sphi 0, %s43
      %s60 = sphi 0, %s44
      %s66 = sphi 0, %s68
      %s69 = sphi 0, %s66
      %s70 = sphi 0, %s69
      %s86 = sphi 0, %s70
      %s90 = sphi 0, %s90
      %s92 = sphi 0, %s90
      %s93 = sphi 0, %s92
      %s107 = sphi 0, %s93
      %s113 = sphi 0, %s115
      %s116 = sphi 0, %s113
      %s117 = sphi 0, %s116
      %s133 = sphi 0, %s117
    $region4: #{tpu_custom_call.1} parent=1 // loop_header_branch
      %19 = sbr.rel (%p17) target = $region8
    $region5: #{tpu_custom_call.1} parent=1 // loop_body
      %s21 = ssub.s32 %s16, 1
      %s22 = ssub.s32 %s16, 2
      %s29 = sadd.s32 1, %s24
      %p30 = scmp.ge.s32.totalorder %s29, 1
      %s31 = scalar_select %p30, 0, %s29
      %s32 = sadd.s32 1, %s23
      %s33 = scalar_select %p30, %s32, %s23
      %p34 = scmp.ge.s32.totalorder %s33, 2
      %s35 = scalar_select %p34, 0, %s33
      %s36 = ssub.s32 %s23, %s35
      %s37 = ssub.s32 %s24, %s31
      %s38 = sor.u32 %s36, %s37
      %p39 = scmp.eq.s32.totalorder %s38, 0
      %s41 = sadd.s32 %s40, 1
      %s42 = scalar_select %p39, %s40, %s41
      %p45 = pneg %p39
      %p46 = scmp.eq.s32.totalorder %s16, 1
      %p47 = por %p45, %p46
      %p48 = scmp.ne.s32.totalorder %s40, %s43
      %p49 = scmp.eq.s32.totalorder %s16, 0
      %p50 = por %p48, %p49
      %p51 = scmp.ne.s32.totalorder %s40, %s43
      %p52 = scmp.eq.s32.totalorder %s21, 1
      %p53 = por %p51, %p52
      %p54 = scmp.ne.s32.totalorder %s43, %s44
      %p55 = scmp.eq.s32.totalorder %s21, 0
      %p56 = por %p54, %p55
      %p57 = scmp.ne.s32.totalorder %s43, %s44
      %p58 = scmp.eq.s32.totalorder %s22, 1
      %p59 = por %p57, %p58
      %p61 = scmp.ne.s32.totalorder %s44, %s60
      %p62 = scmp.eq.s32.totalorder %s22, 0
      %p63 = por %p61, %p62
      %s64 = ssub.s32 %s24, %s31
      %p65 = scmp.eq.s32.totalorder %s64, 0
      %s67 = sadd.s32 %s66, 1
      %s68 = scalar_select %p65, %s66, %s67
      %p71 = pneg %p65
      %p72 = scmp.eq.s32.totalorder %s16, 1
      %p73 = por %p71, %p72
      %p74 = scmp.ne.s32.totalorder %s66, %s69
      %p75 = scmp.eq.s32.totalorder %s16, 0
      %p76 = por %p74, %p75
      %p77 = scmp.ne.s32.totalorder %s66, %s69
      %p78 = scmp.eq.s32.totalorder %s21, 1
      %p79 = por %p77, %p78
      %p80 = scmp.ne.s32.totalorder %s69, %s70
      %p81 = scmp.eq.s32.totalorder %s21, 0
      %p82 = por %p80, %p81
      %p83 = scmp.ne.s32.totalorder %s69, %s70
      %p84 = scmp.eq.s32.totalorder %s22, 1
      %p85 = por %p83, %p84
      %p87 = scmp.ne.s32.totalorder %s70, %s86
      %p88 = scmp.eq.s32.totalorder %s22, 0
      %p89 = por %p87, %p88
      %s91 = sadd.s32 %s90, 1
      %p94 = scmp.eq.s32.totalorder %s16, 1
      %p95 = scmp.ne.s32.totalorder %s90, %s92
      %p96 = scmp.eq.s32.totalorder %s16, 0
      %p97 = por %p95, %p96
      %p98 = scmp.ne.s32.totalorder %s90, %s92
      %p99 = scmp.eq.s32.totalorder %s21, 1
      %p100 = por %p98, %p99
      %p101 = scmp.ne.s32.totalorder %s92, %s93
      %p102 = scmp.eq.s32.totalorder %s21, 0
      %p103 = por %p101, %p102
      %p104 = scmp.ne.s32.totalorder %s92, %s93
      %p105 = scmp.eq.s32.totalorder %s22, 1
      %p106 = por %p104, %p105
      %p108 = scmp.ne.s32.totalorder %s93, %s107
      %p109 = scmp.eq.s32.totalorder %s22, 0
      %p110 = por %p108, %p109
      %s111 = ssub.s32 %s23, %s35
      %p112 = scmp.eq.s32.totalorder %s111, 0
      %s114 = sadd.s32 %s113, 1
      %s115 = scalar_select %p112, %s113, %s114
      %p118 = pneg %p112
      %p119 = scmp.eq.s32.totalorder %s16, 1
      %p120 = por %p118, %p119
      %p121 = scmp.ne.s32.totalorder %s113, %s116
      %p122 = scmp.eq.s32.totalorder %s16, 0
      %p123 = por %p121, %p122
      %p124 = scmp.ne.s32.totalorder %s113, %s116
      %p125 = scmp.eq.s32.totalorder %s21, 1
      %p126 = por %p124, %p125
      %p127 = scmp.ne.s32.totalorder %s116, %s117
      %p128 = scmp.eq.s32.totalorder %s21, 0
      %p129 = por %p127, %p128
      %p130 = scmp.ne.s32.totalorder %s116, %s117
      %p131 = scmp.eq.s32.totalorder %s22, 1
      %p132 = por %p130, %p131
      %p134 = scmp.ne.s32.totalorder %s117, %s133
      %p135 = scmp.eq.s32.totalorder %s22, 0
      %p136 = por %p134, %p135
      %p137 = scmp.le.s32.totalorder 1, %s16
      %p138 = scmp.lt.s32.totalorder %s16, 3
      %p139 = pnand %p137, %p138
      %p140 = pneg %p139
      // Predicated region
      $region9: #{tpu_custom_call.1} parent=5 // pred_check
        _
      $region10: #{tpu_custom_call.1} parent=5 // pred_check_branch
        %142 = sbr.rel (%p139) target = $region12
      $region11: #{tpu_custom_call.1} parent=5 // pred_region
        %s143 = ssub.s32 %s16, 1
        // Predicated region
        $region13: #{tpu_custom_call.1} parent=11 // pred_check
          %p144 = pneg %p82
        $region14: #{tpu_custom_call.1} parent=11 // pred_check_branch
          %146 = sbr.rel (%p144) target = $region16
        $region15: #{tpu_custom_call.1} parent=11 // pred_region
          %s147 = smul.u32 16, %s26
          %s149 = ssub.s32 1024, 1024
          %150 = vsyncadd [#allocation7], %s149
          %s151 = smul.addr %s147, 64
          %s152 = scalar_lea.hbm %s1, %s151
          %s153 = sshll.u32 [#allocation6], 4
          %s154 = int_to_ptr.vmem [resolvable:$true] %s153
          %159 = dma.hbm_to_vmem [thread:$0]  %s152, 1024, %s154, [#allocation7], 64, 64, 4
        $region16: #{tpu_custom_call.1} parent=11 // pred_fallthru
          _
        // Predicated region
        $region17: #{tpu_custom_call.1} parent=11 // pred_check
          %p160 = pneg %p103
        $region18: #{tpu_custom_call.1} parent=11 // pred_check_branch
          %162 = sbr.rel (%p160) target = $region20
        $region19: #{tpu_custom_call.1} parent=11 // pred_region
          _
        $region20: #{tpu_custom_call.1} parent=11 // pred_fallthru
          _
      $region12: #{tpu_custom_call.1} parent=5 // pred_fallthru
        _
      %p163 = scmp.lt.s32.totalorder %s16, 2
      // Predicated region
      $region21: #{tpu_custom_call.1} parent=5 // pred_check
        %p164 = pneg %p163
      $region22: #{tpu_custom_call.1} parent=5 // pred_check_branch
        %166 = sbr.rel (%p164) target = $region24
      $region23: #{tpu_custom_call.1} parent=5 // pred_region
        // Predicated region
        $region25: #{tpu_custom_call.1} parent=23 // pred_check
          %p167 = pneg %p50
        $region26: #{tpu_custom_call.1} parent=23 // pred_check_branch
          %169 = sbr.rel (%p167) target = $region28
        $region27: #{tpu_custom_call.1} parent=23 // pred_region
          %s170 = sand.u32 %s40, 1
          %s171 = scalar_lea.sflag [#allocation4], %s170
          %s172 = sand.u32 %s40, 1
          %s173 = smul.addr %s172, 32
          %s174 = scalar_lea.vmem [#allocation3], %s173
          %s175 = smul.u32 8, %s23
          %s177 = ssub.s32 512, 512
          %178 = vsyncadd %s171, %s177
          %s179 = sadd.s32 %s24, %s175
          %s180 = smul.addr %s179, 64
          %s181 = scalar_lea.hbm %s0, %s180
          %s182 = sshll.u32 %s174, 4
          %s183 = int_to_ptr.vmem [resolvable:$true] %s182
          %188 = dma.hbm_to_vmem [thread:$0]  %s181, 512, %s183, %s171, 64, 64, 4
        $region28: #{tpu_custom_call.1} parent=23 // pred_fallthru
          _
      $region24: #{tpu_custom_call.1} parent=5 // pred_fallthru
        _
      %p189 = scmp.le.s32.totalorder 1, %s16
      %p190 = scmp.lt.s32.totalorder %s16, 3
      %p191 = pnand %p189, %p190
      %p192 = pneg %p191
      // Predicated region
      $region29: #{tpu_custom_call.1} parent=5 // pred_check
        _
      $region30: #{tpu_custom_call.1} parent=5 // pred_check_branch
        %194 = sbr.rel (%p191) target = $region32
      $region31: #{tpu_custom_call.1} parent=5 // pred_region
        %s195 = ssub.s32 %s16, 1
        %s196 = sand.u32 %s43, 1
        %s197 = scalar_lea.sflag [#allocation4], %s196
        %s198 = sand.u32 %s43, 1
        %s199 = smul.addr %s198, 32
        %s200 = scalar_lea.vmem [#allocation3], %s199
        // Predicated region
        $region33: #{tpu_custom_call.1} parent=31 // pred_check
          %p201 = pneg %p56
        $region34: #{tpu_custom_call.1} parent=31 // pred_check_branch
          %203 = sbr.rel (%p201) target = $region36
        $region35: #{tpu_custom_call.1} parent=31 // pred_region
          %204 = dma.done %s197, 512
        $region36: #{tpu_custom_call.1} parent=31 // pred_fallthru
          _
        // Predicated region
        $region37: #{tpu_custom_call.1} parent=31 // pred_check
          %p205 = pneg %p82
        $region38: #{tpu_custom_call.1} parent=31 // pred_check_branch
          %207 = sbr.rel (%p205) target = $region40
        $region39: #{tpu_custom_call.1} parent=31 // pred_region
          %208 = dma.done [#allocation7], 1024
        $region40: #{tpu_custom_call.1} parent=31 // pred_fallthru
          _
        %s209 = sand.u32 %s43, 1
        %s210 = scalar_lea.sflag [#allocation4], %s209
        %s211 = sand.u32 %s43, 1
        %s212 = smul.addr %s211, 32
        %s213 = scalar_lea.vmem [#allocation3], %s212
        %p214 = pneg %p56
        %p215 = pneg %p53
        %p216 = pneg %p82
        %p217 = pneg %p79
        %p218 = pneg %p103
        %p219 = pneg %p100
        %p220 = pneg %p129
        %p221 = pneg %p126
        %s222 = sand.u32 %s116, 1
        %s223 = scalar_lea.sflag [#allocation5], %s222
        %s224 = sand.u32 %s116, 1
        %s225 = smul.addr %s224, 64
        %s226 = scalar_lea.vmem [#allocation8], %s225
        %s227 = smul.u32 8, %s25
        %s228 = smul.u32 16, %s26
        %s229 = smul.u32 8, %s25
        %p231 = scmp.eq.s32.totalorder %s26, 0
        // Predicated region
        $region41: #{tpu_custom_call.1} parent=31 // pred_check
          %p232 = pneg %p231
        $region42: #{tpu_custom_call.1} parent=31 // pred_check_branch
          %234 = sbr.rel (%p232) target = $region44
        $region43: #{tpu_custom_call.1} parent=31 // pred_region
          %235 = vst [vmem:[#allocation2] sm:$0xff] 0.0
          %236 = vst [vmem:[#allocation2 + $0x8] sm:$0xff] 0.0
          %237 = vst [vmem:[#allocation2 + $0x10] sm:$0xff] 0.0
          %238 = vst [vmem:[#allocation2 + $0x18] sm:$0xff] 0.0
          %239 = vst [vmem:[#allocation2 + $0x20] sm:$0xff] 0.0
          %240 = vst [vmem:[#allocation2 + $0x28] sm:$0xff] 0.0
          %241 = vst [vmem:[#allocation2 + $0x30] sm:$0xff] 0.0
          %242 = vst [vmem:[#allocation2 + $0x38] sm:$0xff] 0.0
        $region44: #{tpu_custom_call.1} parent=31 // pred_fallthru
          _
        %v243 = vld [vmem:[#allocation2] sm:$0xff]
        %v244 = vld [vmem:[#allocation2 + $0x8] sm:$0xff]
        %v245 = vld [vmem:[#allocation2 + $0x10] sm:$0xff]
        %v246 = vld [vmem:[#allocation2 + $0x18] sm:$0xff]
        %v247 = vld [vmem:[#allocation2 + $0x20] sm:$0xff]
        %v248 = vld [vmem:[#allocation2 + $0x28] sm:$0xff]
        %v249 = vld [vmem:[#allocation2 + $0x30] sm:$0xff]
        %v250 = vld [vmem:[#allocation2 + $0x38] sm:$0xff]
        %v251 = vld [vmem:[%s200] sm:$0xf]
        %v252 = vld [vmem:[%s200 + $0x4] sm:$0xf]
        %v253 = vld [vmem:[%s200 + $0x8] sm:$0xf]
        %v254 = vld [vmem:[%s200 + $0xc] sm:$0xf]
        %v255 = vld [vmem:[%s200 + $0x10] sm:$0xf]
        %v256 = vld [vmem:[%s200 + $0x14] sm:$0xf]
        %v257 = vld [vmem:[%s200 + $0x18] sm:$0xf]
        %v258 = vld [vmem:[%s200 + $0x1c] sm:$0xf]
        %v259 = vld [vmem:[#allocation6] sm:$0xf]
        %v260 = vld [vmem:[#allocation6 + $0x4] sm:$0xf]
        %v261 = vld [vmem:[#allocation6 + $0x8] sm:$0xf]
        %v262 = vld [vmem:[#allocation6 + $0xc] sm:$0xf]
        %v263 = vld [vmem:[#allocation6 + $0x10] sm:$0xf]
        %v264 = vld [vmem:[#allocation6 + $0x14] sm:$0xf]
        %v265 = vld [vmem:[#allocation6 + $0x18] sm:$0xf]
        %v266 = vld [vmem:[#allocation6 + $0x1c] sm:$0xf]
        %v267 = vld [vmem:[#allocation6 + $0x20] sm:$0xf]
        %v268 = vld [vmem:[#allocation6 + $0x24] sm:$0xf]
        %v269 = vld [vmem:[#allocation6 + $0x28] sm:$0xf]
        %v270 = vld [vmem:[#allocation6 + $0x2c] sm:$0xf]
        %v271 = vld [vmem:[#allocation6 + $0x30] sm:$0xf]
        %v272 = vld [vmem:[#allocation6 + $0x34] sm:$0xf]
        %v273 = vld [vmem:[#allocation6 + $0x38] sm:$0xf]
        %v274 = vld [vmem:[#allocation6 + $0x3c] sm:$0xf]
        %v283 = vunpack.c.l.b16 %v251
        %v284 = vunpack.c.l.b16 %v252
        %v285 = vunpack.c.l.b16 %v253
        %v286 = vunpack.c.l.b16 %v254
        %v287 = vunpack.c.l.b16 %v255
        %v288 = vunpack.c.l.b16 %v256
        %v289 = vunpack.c.l.b16 %v257
        %v290 = vunpack.c.l.b16 %v258
        %v291 = vpack.c.b16 %v284, %v283
        %v292 = vpack.c.b16 %v286, %v285
        %v293 = vpack.c.b16 %v288, %v287
        %v294 = vpack.c.b16 %v290, %v289
        %v315 = vunpack.c.l.b16 %v259
        %v316 = vunpack.c.l.b16 %v260
        %v317 = vunpack.c.l.b16 %v261
        %v318 = vunpack.c.l.b16 %v262
        %v319 = vunpack.c.l.b16 %v263
        %v320 = vunpack.c.l.b16 %v264
        %v321 = vunpack.c.l.b16 %v265
        %v322 = vunpack.c.l.b16 %v266
        %v323 = vunpack.c.l.b16 %v267
        %v324 = vunpack.c.l.b16 %v268
        %v325 = vunpack.c.l.b16 %v269
        %v326 = vunpack.c.l.b16 %v270
        %v327 = vunpack.c.l.b16 %v271
        %v328 = vunpack.c.l.b16 %v272
        %v329 = vunpack.c.l.b16 %v273
        %v330 = vunpack.c.l.b16 %v274
        %v331 = vpack.c.b16 %v316, %v315
        %v332 = vpack.c.b16 %v318, %v317
        %v333 = vpack.c.b16 %v320, %v319
        %v334 = vpack.c.b16 %v322, %v321
        %v335 = vpack.c.b16 %v324, %v323
        %v336 = vpack.c.b16 %v326, %v325
        %v337 = vpack.c.b16 %v328, %v327
        %v338 = vpack.c.b16 %v330, %v329
        %347 = vmatprep.subr.bf16.mxu0 0
        %348 = vmatpush1.bf16.msra.mxu0 %v338
        %349 = vmatprep.subr.bf16.mxu0 0
        %350 = vmatpush1.bf16.msra.mxu0 %v337
        %351 = vmatprep.subr.bf16.mxu0 0
        %352 = vmatpush1.bf16.msra.mxu0 %v336
        %353 = vmatprep.subr.bf16.mxu0 0
        %354 = vmatpush1.bf16.msra.mxu0 %v335
        %355 = vmatprep.subr.bf16.mxu0 0
        %356 = vmatpush1.bf16.msra.mxu0 %v334
        %357 = vmatprep.subr.bf16.mxu0 0
        %358 = vmatpush1.bf16.msra.mxu0 %v333
        %359 = vmatprep.subr.bf16.mxu0 0
        %360 = vmatpush1.bf16.msra.mxu0 %v332
        %361 = vmatprep.subr.bf16.mxu0 0
        %362 = vmatpush1.bf16.msra.mxu0 %v331
        %363 = vmatprep.subr.bf16.mxu0 0
        %364 = vmatpush2.bf16.msra.mxu0 0
        %365 = vmatprep.subr.bf16.mxu0 0
        %366 = vmatpush2.bf16.msra.mxu0 0
        %367 = vmatprep.subr.bf16.mxu0 0
        %368 = vmatpush2.bf16.msra.mxu0 0
        %369 = vmatprep.subr.bf16.mxu0 0
        %370 = vmatpush2.bf16.msra.mxu0 0
        %371 = vmatprep.subr.bf16.mxu0 0
        %372 = vmatpush2.bf16.msra.mxu0 0
        %373 = vmatprep.subr.bf16.mxu0 0
        %374 = vmatpush2.bf16.msra.mxu0 0
        %375 = vmatprep.subr.bf16.mxu0 0
        %376 = vmatpush2.bf16.msra.mxu0 0
        %377 = vmatprep.subr.bf16.mxu0 0
        %378 = vmatpush2.bf16.msra.mxu0 0
        %379 = vmatprep.mubr.bf16.mxu0 0
        %380 = vmatmul.mubr.bf16.gmra.mxu0 %v291
        %v381 = vpop.f32.mrf.mxu0
        %v382 = vadd.f32 0.0, %v381
        %v383 = vpop.f32.mrf.mxu0
        %v384 = vpop.f32.mrf.mxu0
        %v385 = vadd.f32 0.0, %v384
        %v386 = vpop.f32.mrf.mxu0
        %387 = vmatprep.mubr.bf16.mxu0 0
        %388 = vmatmul.mubr.bf16.gmra.mxu0 %v292
        %v389 = vpop.f32.mrf.mxu0
        %v390 = vadd.f32 0.0, %v389
        %v391 = vpop.f32.mrf.mxu0
        %v392 = vpop.f32.mrf.mxu0
        %v393 = vadd.f32 0.0, %v392
        %v394 = vpop.f32.mrf.mxu0
        %395 = vmatprep.mubr.bf16.mxu0 0
        %396 = vmatmul.mubr.bf16.gmra.mxu0 %v293
        %v397 = vpop.f32.mrf.mxu0
        %v398 = vadd.f32 0.0, %v397
        %v399 = vpop.f32.mrf.mxu0
        %v400 = vpop.f32.mrf.mxu0
        %v401 = vadd.f32 0.0, %v400
        %v402 = vpop.f32.mrf.mxu0
        %403 = vmatprep.mubr.bf16.mxu0 0
        %404 = vmatmul.mubr.bf16.gmra.mxu0 %v294
        %v405 = vpop.f32.mrf.mxu0
        %v406 = vadd.f32 0.0, %v405
        %v407 = vpop.f32.mrf.mxu0
        %v408 = vpop.f32.mrf.mxu0
        %v409 = vadd.f32 0.0, %v408
        %v410 = vpop.f32.mrf.mxu0
        %411 = vdwg.mxu0
        %v412 = vadd.f32 %v243, %v382
        %v413 = vadd.f32 %v244, %v385
        %v414 = vadd.f32 %v245, %v390
        %v415 = vadd.f32 %v246, %v393
        %v416 = vadd.f32 %v247, %v398
        %v417 = vadd.f32 %v248, %v401
        %v418 = vadd.f32 %v249, %v406
        %v419 = vadd.f32 %v250, %v409
        %420 = vst [vmem:[#allocation2] sm:$0xff] %v412
        %421 = vst [vmem:[#allocation2 + $0x8] sm:$0xff] %v413
        %422 = vst [vmem:[#allocation2 + $0x10] sm:$0xff] %v414
        %423 = vst [vmem:[#allocation2 + $0x18] sm:$0xff] %v415
        %424 = vst [vmem:[#allocation2 + $0x20] sm:$0xff] %v416
        %425 = vst [vmem:[#allocation2 + $0x28] sm:$0xff] %v417
        %426 = vst [vmem:[#allocation2 + $0x30] sm:$0xff] %v418
        %427 = vst [vmem:[#allocation2 + $0x38] sm:$0xff] %v419
        // Predicated region
        $region45: #{tpu_custom_call.1} parent=31 // pred_check
          %p428 = pneg %p231
        $region46: #{tpu_custom_call.1} parent=31 // pred_check_branch
          %430 = sbr.rel (%p428) target = $region48
        $region47: #{tpu_custom_call.1} parent=31 // pred_region
          %v431 = vld [vmem:[#allocation2] sm:$0xff]
          %v432 = vld [vmem:[#allocation2 + $0x8] sm:$0xff]
          %v433 = vld [vmem:[#allocation2 + $0x10] sm:$0xff]
          %v434 = vld [vmem:[#allocation2 + $0x18] sm:$0xff]
          %v435 = vld [vmem:[#allocation2 + $0x20] sm:$0xff]
          %v436 = vld [vmem:[#allocation2 + $0x28] sm:$0xff]
          %v437 = vld [vmem:[#allocation2 + $0x30] sm:$0xff]
          %v438 = vld [vmem:[#allocation2 + $0x38] sm:$0xff]
          %v439 = vld [vmem:[%s2] sm:$0x1]
          %v441 = vlaneseq
          %v442 = vshrl.u32 %v441, 7
          %v443 = vsub.s32 0, %v442
          %v444 = vrot.slane %v439, %v443
          %v446 = vadd.f32 %v431, %v444
          %v447 = vadd.f32 %v432, %v444
          %v448 = vadd.f32 %v433, %v444
          %v449 = vadd.f32 %v434, %v444
          %v450 = vadd.f32 %v435, %v444
          %v451 = vadd.f32 %v436, %v444
          %v452 = vadd.f32 %v437, %v444
          %v453 = vadd.f32 %v438, %v444
          %v454 = vmax.f32 %v446, 0.0
          %v455 = vmax.f32 %v447, 0.0
          %v456 = vmax.f32 %v448, 0.0
          %v457 = vmax.f32 %v449, 0.0
          %v458 = vmax.f32 %v450, 0.0
          %v459 = vmax.f32 %v451, 0.0
          %v460 = vmax.f32 %v452, 0.0
          %v461 = vmax.f32 %v453, 0.0
          %462 = vst [vmem:[%s226] sm:$0xff] %v454
          %463 = vst [vmem:[%s226 + $0x8] sm:$0xff] %v455
          %464 = vst [vmem:[%s226 + $0x10] sm:$0xff] %v456
          %465 = vst [vmem:[%s226 + $0x18] sm:$0xff] %v457
          %466 = vst [vmem:[%s226 + $0x20] sm:$0xff] %v458
          %467 = vst [vmem:[%s226 + $0x28] sm:$0xff] %v459
          %468 = vst [vmem:[%s226 + $0x30] sm:$0xff] %v460
          %469 = vst [vmem:[%s226 + $0x38] sm:$0xff] %v461
        $region48: #{tpu_custom_call.1} parent=31 // pred_fallthru
          _
        %s470 = sand.u32 %s116, 1
        %s471 = scalar_lea.sflag [#allocation5], %s470
        %s472 = sand.u32 %s116, 1
        %s473 = smul.addr %s472, 64
        %s474 = scalar_lea.vmem [#allocation8], %s473
        // Predicated region
        $region49: #{tpu_custom_call.1} parent=31 // pred_check
          %p475 = pneg %p126
        $region50: #{tpu_custom_call.1} parent=31 // pred_check_branch
          %477 = sbr.rel (%p475) target = $region52
        $region51: #{tpu_custom_call.1} parent=31 // pred_region
          %s478 = smul.u32 8, %s25
          %s480 = ssub.s32 1024, 1024
          %481 = vsyncadd %s471, %s480
          %s482 = smul.addr %s478, 128
          %s483 = scalar_lea.hbm %s3, %s482
          %s484 = sshll.u32 %s474, 4
          %s485 = int_to_ptr.vmem [resolvable:$true] %s484
          %490 = dma.vmem_to_hbm [thread:$0]  %s485, 1024, %s483, %s471, 128, 128, 8
        $region52: #{tpu_custom_call.1} parent=31 // pred_fallthru
          _
      $region32: #{tpu_custom_call.1} parent=5 // pred_fallthru
        _
      %p491 = scmp.le.s32.totalorder 2, %s16
      // Predicated region
      $region53: #{tpu_custom_call.1} parent=5 // pred_check
        %p492 = pneg %p491
      $region54: #{tpu_custom_call.1} parent=5 // pred_check_branch
        %494 = sbr.rel (%p492) target = $region56
      $region55: #{tpu_custom_call.1} parent=5 // pred_region
        %s495 = ssub.s32 %s16, 2
        // Predicated region
        $region57: #{tpu_custom_call.1} parent=55 // pred_check
          %p496 = pneg %p132
        $region58: #{tpu_custom_call.1} parent=55 // pred_check_branch
          %498 = sbr.rel (%p496) target = $region60
        $region59: #{tpu_custom_call.1} parent=55 // pred_region
          %s499 = sand.u32 %s117, 1
          %s500 = scalar_lea.sflag [#allocation5], %s499
          %s501 = sand.u32 %s117, 1
          %s502 = smul.addr %s501, 64
          %s503 = scalar_lea.vmem [#allocation8], %s502
          %504 = dma.done %s500, 1024
        $region60: #{tpu_custom_call.1} parent=55 // pred_fallthru
          _
      $region56: #{tpu_custom_call.1} parent=5 // pred_fallthru
        _
    $region6: #{tpu_custom_call.1} parent=1 // loop_footer
      %s20 = sadd.s32 1, %s16
    $region7: #{tpu_custom_call.1} parent=1 // loop_footer_branch
      %15 = sbr.rel target = $region3
    $region8: #{tpu_custom_call.1} parent=1 // loop_exit
      _
    %505 = vsyncpa [#allocation4], 1
    %s506 = scalar_lea.sflag [#allocation4], 1
    %507 = vsyncpa %s506, 1
    %508 = vsyncpa [#allocation7], 1
    %509 = vsyncpa [#allocation5], 1
    %s510 = scalar_lea.sflag [#allocation5], 1
    %511 = vsyncpa %s510, 1

</llo_original>
